<compile_context>
chip_gen: v6e
topology: v6e:2x2x1
jax: 0.10.0
libtpu: 0.0.40
codegen_flags: <defaults>
</compile_context>

<pallas_src>
import functools

import jax
import jax.numpy as jnp
from jax import lax
from jax.experimental import pallas as pl
from jax.experimental.pallas import tpu as pltpu

_HIDDEN = 64            # per-branch hidden width
_H2 = 2 * _HIDDEN       # fused hidden lanes: [actor(64) | critic(64)] = 128
_LANES = 128            # lane width of the fused hidden / logit tiles


def _round_up(x, m):
    return (x + m - 1) // m * m


# ----------------------------------------------------------------------------- kernel

def _policy_kernel(x_ref, w_ref, out_ref, *, s_pad, num_actions, out_lanes):
    # Static row offsets into the packed bf16 weight slab. All offsets are multiples
    # of 16 so every slice is aligned to the bf16 (16,128) sublane tile (zero-cost views).
    r2 = s_pad                 # start of block-diagonal layer-2 weight
    r3 = s_pad + _H2           # start of block-diagonal layer-3 weight
    rb = s_pad + 2 * _H2       # start of bias block (row rb = b2, row rb+16 = b3)

    x = x_ref[...]                                   # (TB, s_pad) bf16, col S == 1.0 (bias-1 fold)
    w1 = w_ref[0:r2, :]                              # (s_pad, 128) [aw1|cw1] + b1 row
    w2 = w_ref[r2:r3, :]                             # (128, 128)   blockdiag(aw2, cw2)
    w3 = w_ref[r3:rb, :]                             # (128, 128)   aw3 -> lanes [0,A), cw3 -> lane A
    b2 = w_ref[rb:rb + 1, :].astype(jnp.float32)     # (1, 128)
    b3 = w_ref[rb + 16:rb + 17, :].astype(jnp.float32)

    # Fused actor|critic MLP: 3 bf16 MXU matmuls, f32 accumulation, f32 activations.
    # Layer-1 bias rides the matmul through the constant-1.0 input column.
    h1 = jnp.tanh(jnp.dot(x, w1, preferred_element_type=jnp.float32))
    h2 = jnp.tanh(jnp.dot(h1.astype(jnp.bfloat16), w2,
                          preferred_element_type=jnp.float32) + b2)
    y = jnp.dot(h2.astype(jnp.bfloat16), w3,
                preferred_element_type=jnp.float32) + b3           # (TB, 128) f32

    # Lane masks from a single (1,128) iota (broadcast against the batch tile).
    col = lax.broadcasted_iota(jnp.int32, (1, _LANES), 1)
    is_logit = col < num_actions                                   # actor logit lanes
    val_mask = (col == num_actions).astype(jnp.float32)            # critic value lane

    # Masked softmax over the first `num_actions` lanes; exact f32 divide so each row
    # sums to 1 to f32 precision (fixes the failed sum-to-1 assert).
    masked = jnp.where(is_logit, y, jnp.float32(-1e30))
    m = jnp.max(masked, axis=-1, keepdims=True)
    e = jnp.where(is_logit, jnp.exp(masked - m), jnp.float32(0.0))
    denom = jnp.sum(e, axis=-1, keepdims=True)
    probs = e / denom

    # probs is already 0 in lanes >= num_actions, so a single mul+add places the critic
    # value in lane A. Only the first `out_lanes` lanes are stored (narrow writeback).
    out = probs + val_mask * y
    out_ref[...] = out[:, :out_lanes]


# ----------------------------------------------------------------------------- packing

def pack_params(params):
    """Pack the 12 actor/critic tensors into one bf16, 16-row-aligned weight slab.

    Layout (rows):
      [0, s_pad)          layer-1 weight [aw1 | cw1]; row `state_dim` holds [ab1 | cb1]
                          (consumed by a constant-1.0 input column -> bias fused in MXU)
      [s_pad, s_pad+128)  block-diagonal layer-2 weight
      [.., ..+128)        layer-3 weight (actor logits -> lanes [0,A), critic -> lane A)
      [.., ..+32)         bias block: row 0 = b2, row 16 = b3 (16-aligned slices)
    """
    state_dim = params["aw1"].shape[0]
    num_actions = params["aw3"].shape[1]
    assert num_actions + 1 <= _LANES, "num_actions+1 must fit in 128 lanes"
    s_pad = _round_up(state_dim + 1, 16)   # +1 reserves the constant-1 bias column

    w1 = jnp.zeros((s_pad, _H2), jnp.float32)
    w1 = w1.at[:state_dim, :_HIDDEN].set(params["aw1"])
    w1 = w1.at[:state_dim, _HIDDEN:].set(params["cw1"])
    w1 = w1.at[state_dim, :_HIDDEN].set(params["ab1"].reshape(-1))   # fused bias-1 row
    w1 = w1.at[state_dim, _HIDDEN:].set(params["cb1"].reshape(-1))

    w2 = jnp.zeros((_H2, _H2), jnp.float32)
    w2 = w2.at[:_HIDDEN, :_HIDDEN].set(params["aw2"])
    w2 = w2.at[_HIDDEN:, _HIDDEN:].set(params["cw2"])

    w3 = jnp.zeros((_H2, _LANES), jnp.float32)
    w3 = w3.at[:_HIDDEN, :num_actions].set(params["aw3"])
    w3 = w3.at[_HIDDEN:, num_actions:num_actions + 1].set(params["cw3"])

    b = jnp.zeros((32, _LANES), jnp.float32)
    b = b.at[0, :_HIDDEN].set(params["ab2"].reshape(-1))
    b = b.at[0, _HIDDEN:].set(params["cb2"].reshape(-1))
    b = b.at[16, :num_actions].set(params["ab3"].reshape(-1))
    b = b.at[16, num_actions].set(params["cb3"].reshape(-1)[0])

    slab = jnp.concatenate([w1, w2, w3, b], axis=0).astype(jnp.bfloat16)
    return slab, s_pad, num_actions


# ----------------------------------------------------------------------------- wrapper

def policy_model_forward(state, packed_slab, s_pad, num_actions, *, block_rows=4096):
    """Returns (action_prob [B, num_actions], value [B, 1])."""
    B, S = state.shape
    out_lanes = _round_up(num_actions + 1, 8)        # 8 lanes for A=6: probs + value

    # Batch tiling: 16-row granularity (bf16 sublane tile), balanced tiles to minimize
    # tail padding, and >=2 grid steps whenever possible so v7x's 2nd TC gets work.
    rows = _round_up(B, 16)
    n_tiles = max((rows + block_rows - 1) // block_rows, 2 if rows > 16 else 1)
    tb = _round_up((rows + n_tiles - 1) // n_tiles, 16)
    b_pad = tb * n_tiles

    # Pad batch/features; constant 1.0 in column S feeds the fused layer-1 bias row.
    x = jnp.zeros((b_pad, s_pad), jnp.float32)
    x = x.at[:B, :S].set(state.astype(jnp.float32))
    x = x.at[:B, S].set(1.0)
    x = x.astype(jnp.bfloat16)

    kernel = functools.partial(_policy_kernel, s_pad=s_pad,
                               num_actions=num_actions, out_lanes=out_lanes)
    out = pl.pallas_call(
        kernel,
        out_shape=jax.ShapeDtypeStruct((b_pad, out_lanes), jnp.float32),
        grid=(n_tiles,),
        in_specs=[
            pl.BlockSpec((tb, s_pad), lambda i: (i, 0)),            # streamed batch tile
            # Weight slab: constant block index -> fetched once, not re-DMA'd per step.
            pl.BlockSpec(packed_slab.shape, lambda i: (0, 0)),
        ],
        out_specs=pl.BlockSpec((tb, out_lanes), lambda i: (i, 0)),  # narrow 8-lane writeback
        compiler_params=pltpu.CompilerParams(
            dimension_semantics=("parallel",),                      # megacore / v7x 2-TC
            vmem_limit_bytes=32 * 1024 * 1024),                     # covers TB up to ~4-8K rows
    )(x, packed_slab)

    probs = out[:B, :num_actions]
    value = out[:B, num_actions:num_actions + 1]
    return probs, value


# ----------------------------------------------------------------------------- init / ref

def _linear_init(key, fan_in, fan_out):
    """Mimics torch.nn.Linear default init: U[-1/sqrt(fan_in), 1/sqrt(fan_in)]."""
    kw, kb = jax.random.split(key)
    bound = 1.0 / jnp.sqrt(jnp.float32(fan_in))
    w = jax.random.uniform(kw, (fan_in, fan_out), jnp.float32, -bound, bound)
    b = jax.random.uniform(kb, (1, fan_out), jnp.float32, -bound, bound)
    return w, b


def make_params(key, state_dim, num_actions, hidden=_HIDDEN):
    keys = jax.random.split(key, 6)
    aw1, ab1 = _linear_init(keys[0], state_dim, hidden)
    aw2, ab2 = _linear_init(keys[1], hidden, hidden)
    aw3, ab3 = _linear_init(keys[2], hidden, num_actions)
    cw1, cb1 = _linear_init(keys[3], state_dim, hidden)
    cw2, cb2 = _linear_init(keys[4], hidden, hidden)
    cw3, cb3 = _linear_init(keys[5], hidden, 1)
    return dict(aw1=aw1, ab1=ab1, aw2=aw2, ab2=ab2, aw3=aw3, ab3=ab3,
                cw1=cw1, cb1=cb1, cw2=cw2, cb2=cb2, cw3=cw3, cb3=cb3)


def _reference(state, p, matmul_dtype=jnp.float32):
    """Pure-JAX reference. matmul_dtype=bf16 mirrors the kernel's mixed precision."""
    def lin(x, w, b):
        z = jnp.dot(x.astype(matmul_dtype), w.astype(matmul_dtype),
                    preferred_element_type=jnp.float32)
        return z + b.astype(matmul_dtype).astype(jnp.float32)

    h = jnp.tanh(lin(state, p["aw1"], p["ab1"]))
    h = jnp.tanh(lin(h, p["aw2"], p["ab2"]))
    probs = jax.nn.softmax(lin(h, p["aw3"], p["ab3"]), axis=-1)
    g = jnp.tanh(lin(state, p["cw1"], p["cb1"]))
    g = jnp.tanh(lin(g, p["cw2"], p["cb2"]))
    value = lin(g, p["cw3"], p["cb3"])
    return probs, value


# ----------------------------------------------------------------------------- demo

if __name__ == "__main__":
    # Small shapes consistent with the module: state_dim=4, num_actions=6, batch=8.
    STATE_DIM, NUM_ACTIONS, BATCH = 4, 6, 8

    key = jax.random.PRNGKey(0)
    k_state, k_params = jax.random.split(key)
    state = jax.random.normal(k_state, (BATCH, STATE_DIM), jnp.float32)
    params = make_params(k_params, STATE_DIM, NUM_ACTIONS)

    # Pack once (amortized across rollout steps), then run the fused kernel.
    slab, s_pad, num_actions = pack_params(params)
    probs, value = policy_model_forward(state, slab, s_pad, num_actions)
    jax.block_until_ready((probs, value))

    assert probs.shape == (BATCH, NUM_ACTIONS) and value.shape == (BATCH, 1)

    # Tight check against a reference that mirrors the kernel's bf16-matmul / f32-accum
    # precision (only accumulation-order / transcendental rounding differs).
    mp_probs, mp_value = _reference(state, params, matmul_dtype=jnp.bfloat16)
    assert jnp.allclose(probs, mp_probs, atol=2e-3, rtol=2e-3)
    assert jnp.allclose(value, mp_value, atol=2e-3, rtol=2e-3)

    # Loose check against the exact-f32 (PyTorch-equivalent) math; slack covers the
    # intentional bf16 matmul inputs.
    f32_probs, f32_value = _reference(state, params)
    assert jnp.allclose(probs, f32_probs, atol=5e-2, rtol=5e-2)
    assert jnp.allclose(value, f32_value, atol=5e-2, rtol=5e-2)

    # Exact f32 softmax divide in-kernel -> rows sum to 1 to f32 precision.
    assert jnp.allclose(jnp.sum(probs, axis=-1), 1.0, atol=1e-4)

    # NOTE: PolicyModel.forward() itself raises NotImplementedError; the useful compute
    # lives in act()/evaluate() via self.actor / self.critic, which is what the kernel
    # implements. Categorical sampling / log_prob / entropy stay outside the kernel,
    # computed from the returned probs.
    print("KERNEL_OK")
</pallas_src>

<mosaic_0001>
module attributes {stable_mosaic.version = 11 : i64} {
  func.func @_policy_kernel(%arg0: i32, %arg1: memref<16x16xbf16, #tpu.memory_space<vmem>>, %arg2: memref<304x128xbf16, #tpu.memory_space<vmem>>, %arg3: memref<16x8xf32, #tpu.memory_space<vmem>>) attributes {dimension_semantics = [#tpu.dimension_semantics<parallel>], iteration_bounds = array<i64: 1>, scalar_prefetch = 0 : i64, scratch_operands = 0 : i64, tpu.core_type = #tpu.core_type<tc>, window_params = [{transform_indices = @transform_0, window_bounds = array<i64: 16, 16>}, {pipeline_mode = #tpu.pipeline_mode<synchronous>, transform_indices = @transform_1, window_bounds = array<i64: 304, 128>}, {transform_indices = @transform_2, window_bounds = array<i64: 16, 8>}]} {
    %c0 = arith.constant 0 : index
    %c0_0 = arith.constant 0 : index
    %0 = vector.load %arg1[%c0, %c0_0] : memref<16x16xbf16, #tpu.memory_space<vmem>>, vector<16x16xbf16>
    %c0_1 = arith.constant 0 : index
    %c0_2 = arith.constant 0 : index
    %1 = vector.load %arg2[%c0_1, %c0_2] : memref<304x128xbf16, #tpu.memory_space<vmem>>, vector<16x128xbf16>
    %c16 = arith.constant 16 : index
    %c0_3 = arith.constant 0 : index
    %2 = vector.load %arg2[%c16, %c0_3] : memref<304x128xbf16, #tpu.memory_space<vmem>>, vector<128x128xbf16>
    %c144 = arith.constant 144 : index
    %c0_4 = arith.constant 0 : index
    %3 = vector.load %arg2[%c144, %c0_4] : memref<304x128xbf16, #tpu.memory_space<vmem>>, vector<128x128xbf16>
    %c272 = arith.constant 272 : index
    %c0_5 = arith.constant 0 : index
    %4 = vector.load %arg2[%c272, %c0_5] : memref<304x128xbf16, #tpu.memory_space<vmem>>, vector<1x128xbf16>
    %5 = arith.extf %4 : vector<1x128xbf16> to vector<1x128xf32>
    %c288 = arith.constant 288 : index
    %c0_6 = arith.constant 0 : index
    %6 = vector.load %arg2[%c288, %c0_6] : memref<304x128xbf16, #tpu.memory_space<vmem>>, vector<1x128xbf16>
    %7 = arith.extf %6 : vector<1x128xbf16> to vector<1x128xf32>
    %cst = arith.constant dense<0.000000e+00> : vector<16x128xf32>
    %8 = tpu.matmul %0, %1, %cst {dimension_numbers = #tpu.dot_dimension_numbers<[1], [0], [0], [1], [0, 0, 1, 1], [], []>} : vector<16x16xbf16>, vector<16x128xbf16>, vector<16x128xf32> -> vector<16x128xf32>
    %9 = math.tanh %8 : vector<16x128xf32>
    %10 = arith.truncf %9 : vector<16x128xf32> to vector<16x128xbf16>
    %cst_7 = arith.constant dense<0.000000e+00> : vector<16x128xf32>
    %11 = tpu.matmul %10, %2, %cst_7 {dimension_numbers = #tpu.dot_dimension_numbers<[1], [0], [0], [1], [0, 0, 1, 1], [], []>} : vector<16x128xbf16>, vector<128x128xbf16>, vector<16x128xf32> -> vector<16x128xf32>
    %12 = vector.broadcast %5 : vector<1x128xf32> to vector<16x128xf32>
    %13 = arith.addf %11, %12 : vector<16x128xf32>
    %14 = math.tanh %13 : vector<16x128xf32>
    %15 = arith.truncf %14 : vector<16x128xf32> to vector<16x128xbf16>
    %cst_8 = arith.constant dense<0.000000e+00> : vector<16x128xf32>
    %16 = tpu.matmul %15, %3, %cst_8 {dimension_numbers = #tpu.dot_dimension_numbers<[1], [0], [0], [1], [0, 0, 1, 1], [], []>} : vector<16x128xbf16>, vector<128x128xbf16>, vector<16x128xf32> -> vector<16x128xf32>
    %17 = vector.broadcast %7 : vector<1x128xf32> to vector<16x128xf32>
    %18 = arith.addf %16, %17 : vector<16x128xf32>
    %19 = tpu.iota {dimensions = array<i32: 1>} : vector<1x128xi32>
    %c6_i32 = arith.constant 6 : i32
    %20 = vector.broadcast %c6_i32 : i32 to vector<1x128xi32>
    %21 = arith.cmpi slt, %19, %20 : vector<1x128xi32>
    %c6_i32_9 = arith.constant 6 : i32
    %22 = vector.broadcast %c6_i32_9 : i32 to vector<1x128xi32>
    %23 = arith.cmpi eq, %19, %22 : vector<1x128xi32>
    %24 = arith.extui %23 : vector<1x128xi1> to vector<1x128xi32>
    %25 = arith.sitofp %24 : vector<1x128xi32> to vector<1x128xf32>
    %cst_10 = arith.constant -1.000000e+30 : f32
    %26 = vector.shape_cast %21 : vector<1x128xi1> to vector<1x128xi1>
    %27 = vector.broadcast %26 : vector<1x128xi1> to vector<16x128xi1>
    %28 = vector.broadcast %cst_10 : f32 to vector<16x128xf32>
    %29 = arith.select %27, %18, %28 : vector<16x128xi1>, vector<16x128xf32>
    %cst_11 = arith.constant dense<0xFF800000> : vector<16xf32>
    %30 = vector.multi_reduction <maximumf>, %29, %cst_11 [1] : vector<16x128xf32> to vector<16xf32>
    %31 = vector.shape_cast %30 : vector<16xf32> to vector<16x1xf32>
    %32 = vector.broadcast %31 : vector<16x1xf32> to vector<16x128xf32>
    %33 = arith.subf %29, %32 : vector<16x128xf32>
    %34 = math.exp %33 : vector<16x128xf32>
    %cst_12 = arith.constant 0.000000e+00 : f32
    %35 = vector.shape_cast %21 : vector<1x128xi1> to vector<1x128xi1>
    %36 = vector.broadcast %35 : vector<1x128xi1> to vector<16x128xi1>
    %37 = vector.broadcast %cst_12 : f32 to vector<16x128xf32>
    %38 = arith.select %36, %34, %37 : vector<16x128xi1>, vector<16x128xf32>
    %cst_13 = arith.constant dense<0.000000e+00> : vector<16xf32>
    %39 = vector.multi_reduction <add>, %38, %cst_13 [1] : vector<16x128xf32> to vector<16xf32>
    %40 = vector.shape_cast %39 : vector<16xf32> to vector<16x1xf32>
    %41 = vector.broadcast %40 : vector<16x1xf32> to vector<16x128xf32>
    %42 = arith.divf %38, %41 : vector<16x128xf32>
    %43 = vector.broadcast %25 : vector<1x128xf32> to vector<16x128xf32>
    %44 = arith.mulf %43, %18 : vector<16x128xf32>
    %45 = arith.addf %42, %44 : vector<16x128xf32>
    %46 = vector.extract_strided_slice %45 {offsets = [0, 0], sizes = [16, 8], strides = [1, 1]} : vector<16x128xf32> to vector<16x8xf32>
    %c0_14 = arith.constant 0 : index
    %c0_15 = arith.constant 0 : index
    %47 = vector.load %arg3[%c0_14, %c0_15] : memref<16x8xf32, #tpu.memory_space<vmem>>, vector<16x8xf32>
    tpu.vector_store %arg3[%c0_14, %c0_15], %46 {strides = array<i32>} : memref<16x8xf32, #tpu.memory_space<vmem>>, vector<16x8xf32>,
    return
  }
  func.func @transform_0(%arg0: i32) -> (i32, i32) {
    %c0_i32 = arith.constant 0 : i32
    %c0_i32_0 = arith.constant 0 : i32
    return %arg0, %c0_i32 : i32, i32
  }
  func.func @transform_1(%arg0: i32) -> (i32, i32) {
    %c0_i32 = arith.constant 0 : i32
    %c0_i32_0 = arith.constant 0 : i32
    %c0_i32_1 = arith.constant 0 : i32
    return %c0_i32, %c0_i32_0 : i32, i32
  }
  func.func @transform_2(%arg0: i32) -> (i32, i32) {
    %c0_i32 = arith.constant 0 : i32
    %c0_i32_0 = arith.constant 0 : i32
    return %arg0, %c0_i32 : i32, i32
  }
}

</mosaic_0001>

<llo_original>
// kernel: tpu_custom_call.1
$region0: #{tpu_custom_call.1}
  #allocation0 [shape = 'u32[]', space=smem, size = 0x4, offset = 0x4, fixed_abs, tag = 'smem constant byte address 0x4 - core index']
  #allocation1 [shape = 'u32[144,128]{1,0:T(1,128)}', space=vmem, size = 0x12000, scoped, tag = 'internal scratch']
  %s0 = inlined_call_operand.hbm [shape: bf16[16,16], index: 0, kind: input, shape index: {}]
  %s1 = inlined_call_operand.hbm [shape: bf16[304,128], index: 1, kind: input, shape index: {}]
  %s2 = inlined_call_operand.vmem [shape: f32[16,8], index: 2, kind: output, shape index: {}]
  %s3 = sld [smem:[#allocation0]]
  $region26: #{tpu_custom_call.1} parent=0
    _
  %s5 = ssub.s32 1, %s3
  %s6 = scalar_select 0, %s5, %s3
  $region1: #{tpu_custom_call.1} parent=0
    #allocation2 [shape = 'u8[4096]{0}', space=vmem, size = 0x1000, scoped, tag = 'input window, operand 0, single buffered']
    #allocation3 [shape = 's32[1]{0}', space=sflag, size = 0x4, scoped, tag = 'scoped memory for tpu_custom_call.1']
    #allocation4 [shape = 'u8[77824]{0}', space=vmem, size = 0x13000, scoped, tag = 'input window, operand 1, single buffered']
    #allocation5 [shape = 's32[1]{0}', space=sflag, size = 0x4, scoped, tag = 'scoped memory for tpu_custom_call.1']
    %7 = vsyncpa [#allocation3], 0
    %8 = vsyncpa [#allocation5], 0
    // Predicated region
    $region2: #{tpu_custom_call.1} parent=1 // pred_check
      _
    $region3: #{tpu_custom_call.1} parent=1 // pred_check_branch
      %10 = sbr.rel (0) target = $region5
    $region4: #{tpu_custom_call.1} parent=1 // pred_region
      %s12 = ssub.s32 128, 128
      %13 = vsyncadd [#allocation3], %s12
      %s14 = sshll.u32 [#allocation2], 4
      %s15 = int_to_ptr.vmem [resolvable:$true] %s14
      %20 = dma.hbm_to_vmem [thread:$0]  %s0, 128, %s15, [#allocation3], 64, 64, 4
    $region5: #{tpu_custom_call.1} parent=1 // pred_fallthru
      _
    // Predicated region
    $region6: #{tpu_custom_call.1} parent=1 // pred_check
      _
    $region7: #{tpu_custom_call.1} parent=1 // pred_check_branch
      %22 = sbr.rel (0) target = $region9
    $region8: #{tpu_custom_call.1} parent=1 // pred_region
      %s24 = ssub.s32 2432, 2432
      %25 = vsyncadd [#allocation5], %s24
      %s26 = sshll.u32 [#allocation4], 4
      %s27 = int_to_ptr.vmem [resolvable:$true] %s26
      %32 = dma.hbm_to_vmem [thread:$0]  %s1, 2432, %s27, [#allocation5], 64, 64, 4
    $region9: #{tpu_custom_call.1} parent=1 // pred_fallthru
      _
    // Predicated region
    $region10: #{tpu_custom_call.1} parent=1 // pred_check
      _
    $region11: #{tpu_custom_call.1} parent=1 // pred_check_branch
      %34 = sbr.rel (0) target = $region13
    $region12: #{tpu_custom_call.1} parent=1 // pred_region
      %35 = dma.done [#allocation3], 128
    $region13: #{tpu_custom_call.1} parent=1 // pred_fallthru
      _
    // Predicated region
    $region14: #{tpu_custom_call.1} parent=1 // pred_check
      _
    $region15: #{tpu_custom_call.1} parent=1 // pred_check_branch
      %37 = sbr.rel (0) target = $region17
    $region16: #{tpu_custom_call.1} parent=1 // pred_region
      %38 = dma.done [#allocation5], 2432
    $region17: #{tpu_custom_call.1} parent=1 // pred_fallthru
      _
    %v40 = vld [vmem:[#allocation2] sm:$0xf]
    %v41 = vld [vmem:[#allocation2 + $0x4] sm:$0xf]
    %v42 = vld [vmem:[#allocation4] sm:$0xf]
    %v43 = vld [vmem:[#allocation4 + $0x4] sm:$0xf]
    %v44 = vld [vmem:[#allocation4 + $0x8] sm:$0xf]
    %v45 = vld [vmem:[#allocation4 + $0xc] sm:$0xf]
    %v46 = vld [vmem:[#allocation4 + $0x10] sm:$0xf]
    %v47 = vld [vmem:[#allocation4 + $0x14] sm:$0xf]
    %v48 = vld [vmem:[#allocation4 + $0x18] sm:$0xf]
    %v49 = vld [vmem:[#allocation4 + $0x1c] sm:$0xf]
    %v50 = vld [vmem:[#allocation4 + $0x20] sm:$0xf]
    %v51 = vld [vmem:[#allocation4 + $0x24] sm:$0xf]
    %v52 = vld [vmem:[#allocation4 + $0x28] sm:$0xf]
    %v53 = vld [vmem:[#allocation4 + $0x2c] sm:$0xf]
    %v54 = vld [vmem:[#allocation4 + $0x30] sm:$0xf]
    %v55 = vld [vmem:[#allocation4 + $0x34] sm:$0xf]
    %v56 = vld [vmem:[#allocation4 + $0x38] sm:$0xf]
    %v57 = vld [vmem:[#allocation4 + $0x3c] sm:$0xf]
    %v58 = vld [vmem:[#allocation4 + $0x40] sm:$0xf]
    %v59 = vld [vmem:[#allocation4 + $0x44] sm:$0xf]
    %v60 = vld [vmem:[#allocation4 + $0x48] sm:$0xf]
    %v61 = vld [vmem:[#allocation4 + $0x4c] sm:$0xf]
    %v62 = vld [vmem:[#allocation4 + $0x50] sm:$0xf]
    %v63 = vld [vmem:[#allocation4 + $0x54] sm:$0xf]
    %v64 = vld [vmem:[#allocation4 + $0x58] sm:$0xf]
    %v65 = vld [vmem:[#allocation4 + $0x5c] sm:$0xf]
    %v66 = vld [vmem:[#allocation4 + $0x60] sm:$0xf]
    %v67 = vld [vmem:[#allocation4 + $0x64] sm:$0xf]
    %v68 = vld [vmem:[#allocation4 + $0x68] sm:$0xf]
    %v69 = vld [vmem:[#allocation4 + $0x6c] sm:$0xf]
    %v70 = vld [vmem:[#allocation4 + $0x70] sm:$0xf]
    %v71 = vld [vmem:[#allocation4 + $0x74] sm:$0xf]
    %v72 = vld [vmem:[#allocation4 + $0x78] sm:$0xf]
    %v73 = vld [vmem:[#allocation4 + $0x7c] sm:$0xf]
    %v74 = vld [vmem:[#allocation4 + $0x80] sm:$0xf]
    %v75 = vld [vmem:[#allocation4 + $0x84] sm:$0xf]
    %v76 = vld [vmem:[#allocation4 + $0x88] sm:$0x1]
    %v77 = vunpack.c.l.bf16 %v76
    %v78 = vld [vmem:[#allocation4 + $0x90] sm:$0x1]
    %v79 = vunpack.c.l.bf16 %v78
    %v82 = vunpack.c.l.b16 %v40
    %v83 = vunpack.c.l.b16 %v41
    %v84 = vpack.c.b16 %v83, %v82
    %v87 = vunpack.c.l.b16 %v42
    %v88 = vunpack.c.l.b16 %v43
    %v89 = vpack.c.b16 %v88, %v87
    %vm91 = vcmask 130048
    %v93 = vsel %vm91, %v84, 0
    %95 = vmatprep.subr.bf16.mxu0 0
    %96 = vmatpush1.bf16.msra.mxu0 0
    %97 = vmatprep.subr.bf16.mxu0 0
    %98 = vmatpush1.bf16.msra.mxu0 0
    %99 = vmatprep.subr.bf16.mxu0 0
    %100 = vmatpush1.bf16.msra.mxu0 0
    %101 = vmatprep.subr.bf16.mxu0 0
    %102 = vmatpush1.bf16.msra.mxu0 0
    %103 = vmatprep.subr.bf16.mxu0 0
    %104 = vmatpush1.bf16.msra.mxu0 0
    %105 = vmatprep.subr.bf16.mxu0 0
    %106 = vmatpush1.bf16.msra.mxu0 0
    %107 = vmatprep.subr.bf16.mxu0 0
    %108 = vmatpush1.bf16.msra.mxu0 0
    %109 = vmatprep.subr.bf16.mxu0 0
    %110 = vmatpush1.bf16.msra.mxu0 %v89
    %111 = vmatprep.subr.bf16.mxu0 0
    %112 = vmatpush2.bf16.msra.mxu0 0
    %113 = vmatprep.subr.bf16.mxu0 0
    %114 = vmatpush2.bf16.msra.mxu0 0
    %115 = vmatprep.subr.bf16.mxu0 0
    %116 = vmatpush2.bf16.msra.mxu0 0
    %117 = vmatprep.subr.bf16.mxu0 0
    %118 = vmatpush2.bf16.msra.mxu0 0
    %119 = vmatprep.subr.bf16.mxu0 0
    %120 = vmatpush2.bf16.msra.mxu0 0
    %121 = vmatprep.subr.bf16.mxu0 0
    %122 = vmatpush2.bf16.msra.mxu0 0
    %123 = vmatprep.subr.bf16.mxu0 0
    %124 = vmatpush2.bf16.msra.mxu0 0
    %125 = vmatprep.subr.bf16.mxu0 0
    %126 = vmatpush2.bf16.msra.mxu0 0
    %127 = vmatprep.mubr.bf16.mxu0 0
    %128 = vmatmul.mubr.bf16.gmra.mxu0 %v93
    %v129 = vpop.f32.mrf.mxu0
    %v130 = vadd.f32 0.0, %v129
    %v131 = vpop.f32.mrf.mxu0
    %v132 = vpop.f32.mrf.mxu0
    %v133 = vadd.f32 0.0, %v132
    %v134 = vpop.f32.mrf.mxu0
    %135 = vdwg.mxu0
    %v136 = vtanh.pop %v130
    %v137 = vtanh.pop %v133
    %v138 = vpack.c.bf16 %v137, %v136
    %v139 = vlaneseq
    %v140 = vshrl.u32 %v139, 7
    %v141 = vsub.s32 0, %v140
    %v142 = vrot.slane %v77, %v141
    %v159 = vunpack.c.l.b16 %v44
    %v160 = vunpack.c.l.b16 %v45
    %v161 = vunpack.c.l.b16 %v46
    %v162 = vunpack.c.l.b16 %v47
    %v163 = vunpack.c.l.b16 %v48
    %v164 = vunpack.c.l.b16 %v49
    %v165 = vunpack.c.l.b16 %v50
    %v166 = vunpack.c.l.b16 %v51
    %v167 = vunpack.c.l.b16 %v52
    %v168 = vunpack.c.l.b16 %v53
    %v169 = vunpack.c.l.b16 %v54
    %v170 = vunpack.c.l.b16 %v55
    %v171 = vunpack.c.l.b16 %v56
    %v172 = vunpack.c.l.b16 %v57
    %v173 = vunpack.c.l.b16 %v58
    %v174 = vunpack.c.l.b16 %v59
    %v175 = vpack.c.b16 %v160, %v159
    %v176 = vpack.c.b16 %v162, %v161
    %v177 = vpack.c.b16 %v164, %v163
    %v178 = vpack.c.b16 %v166, %v165
    %v179 = vpack.c.b16 %v168, %v167
    %v180 = vpack.c.b16 %v170, %v169
    %v181 = vpack.c.b16 %v172, %v171
    %v182 = vpack.c.b16 %v174, %v173
    %191 = vmatprep.subr.bf16.mxu0 0
    %192 = vmatpush1.bf16.msra.mxu0 %v182
    %193 = vmatprep.subr.bf16.mxu0 0
    %194 = vmatpush1.bf16.msra.mxu0 %v181
    %195 = vmatprep.subr.bf16.mxu0 0
    %196 = vmatpush1.bf16.msra.mxu0 %v180
    %197 = vmatprep.subr.bf16.mxu0 0
    %198 = vmatpush1.bf16.msra.mxu0 %v179
    %199 = vmatprep.subr.bf16.mxu0 0
    %200 = vmatpush1.bf16.msra.mxu0 %v178
    %201 = vmatprep.subr.bf16.mxu0 0
    %202 = vmatpush1.bf16.msra.mxu0 %v177
    %203 = vmatprep.subr.bf16.mxu0 0
    %204 = vmatpush1.bf16.msra.mxu0 %v176
    %205 = vmatprep.subr.bf16.mxu0 0
    %206 = vmatpush1.bf16.msra.mxu0 %v175
    %207 = vmatprep.subr.bf16.mxu0 0
    %208 = vmatpush2.bf16.msra.mxu0 0
    %209 = vmatprep.subr.bf16.mxu0 0
    %210 = vmatpush2.bf16.msra.mxu0 0
    %211 = vmatprep.subr.bf16.mxu0 0
    %212 = vmatpush2.bf16.msra.mxu0 0
    %213 = vmatprep.subr.bf16.mxu0 0
    %214 = vmatpush2.bf16.msra.mxu0 0
    %215 = vmatprep.subr.bf16.mxu0 0
    %216 = vmatpush2.bf16.msra.mxu0 0
    %217 = vmatprep.subr.bf16.mxu0 0
    %218 = vmatpush2.bf16.msra.mxu0 0
    %219 = vmatprep.subr.bf16.mxu0 0
    %220 = vmatpush2.bf16.msra.mxu0 0
    %221 = vmatprep.subr.bf16.mxu0 0
    %222 = vmatpush2.bf16.msra.mxu0 0
    %223 = vmatprep.mubr.bf16.mxu0 0
    %224 = vmatmul.mubr.bf16.gmra.mxu0 %v138
    %v225 = vpop.f32.mrf.mxu0
    %v226 = vadd.f32 %v142, %v225
    %v227 = vpop.f32.mrf.mxu0
    %v228 = vpop.f32.mrf.mxu0
    %v229 = vadd.f32 %v142, %v228
    %v230 = vpop.f32.mrf.mxu0
    %231 = vdwg.mxu0
    %v232 = vtanh.pop %v226
    %v233 = vtanh.pop %v229
    %v234 = vpack.c.bf16 %v233, %v232
    %v235 = vlaneseq
    %v236 = vshrl.u32 %v235, 7
    %v237 = vsub.s32 0, %v236
    %v238 = vrot.slane %v79, %v237
    %v255 = vunpack.c.l.b16 %v60
    %v256 = vunpack.c.l.b16 %v61
    %v257 = vunpack.c.l.b16 %v62
    %v258 = vunpack.c.l.b16 %v63
    %v259 = vunpack.c.l.b16 %v64
    %v260 = vunpack.c.l.b16 %v65
    %v261 = vunpack.c.l.b16 %v66
    %v262 = vunpack.c.l.b16 %v67
    %v263 = vunpack.c.l.b16 %v68
    %v264 = vunpack.c.l.b16 %v69
    %v265 = vunpack.c.l.b16 %v70
    %v266 = vunpack.c.l.b16 %v71
    %v267 = vunpack.c.l.b16 %v72
    %v268 = vunpack.c.l.b16 %v73
    %v269 = vunpack.c.l.b16 %v74
    %v270 = vunpack.c.l.b16 %v75
    %v271 = vpack.c.b16 %v256, %v255
    %v272 = vpack.c.b16 %v258, %v257
    %v273 = vpack.c.b16 %v260, %v259
    %v274 = vpack.c.b16 %v262, %v261
    %v275 = vpack.c.b16 %v264, %v263
    %v276 = vpack.c.b16 %v266, %v265
    %v277 = vpack.c.b16 %v268, %v267
    %v278 = vpack.c.b16 %v270, %v269
    %287 = vmatprep.subr.bf16.mxu0 0
    %288 = vmatpush1.bf16.msra.mxu0 %v278
    %289 = vmatprep.subr.bf16.mxu0 0
    %290 = vmatpush1.bf16.msra.mxu0 %v277
    %291 = vmatprep.subr.bf16.mxu0 0
    %292 = vmatpush1.bf16.msra.mxu0 %v276
    %293 = vmatprep.subr.bf16.mxu0 0
    %294 = vmatpush1.bf16.msra.mxu0 %v275
    %295 = vmatprep.subr.bf16.mxu0 0
    %296 = vmatpush1.bf16.msra.mxu0 %v274
    %297 = vmatprep.subr.bf16.mxu0 0
    %298 = vmatpush1.bf16.msra.mxu0 %v273
    %299 = vmatprep.subr.bf16.mxu0 0
    %300 = vmatpush1.bf16.msra.mxu0 %v272
    %301 = vmatprep.subr.bf16.mxu0 0
    %302 = vmatpush1.bf16.msra.mxu0 %v271
    %303 = vmatprep.subr.bf16.mxu0 0
    %304 = vmatpush2.bf16.msra.mxu0 0
    %305 = vmatprep.subr.bf16.mxu0 0
    %306 = vmatpush2.bf16.msra.mxu0 0
    %307 = vmatprep.subr.bf16.mxu0 0
    %308 = vmatpush2.bf16.msra.mxu0 0
    %309 = vmatprep.subr.bf16.mxu0 0
    %310 = vmatpush2.bf16.msra.mxu0 0
    %311 = vmatprep.subr.bf16.mxu0 0
    %312 = vmatpush2.bf16.msra.mxu0 0
    %313 = vmatprep.subr.bf16.mxu0 0
    %314 = vmatpush2.bf16.msra.mxu0 0
    %315 = vmatprep.subr.bf16.mxu0 0
    %316 = vmatpush2.bf16.msra.mxu0 0
    %317 = vmatprep.subr.bf16.mxu0 0
    %318 = vmatpush2.bf16.msra.mxu0 0
    %319 = vmatprep.mubr.bf16.mxu0 0
    %320 = vmatmul.mubr.bf16.gmra.mxu0 %v234
    %v321 = vpop.f32.mrf.mxu0
    %v322 = vadd.f32 %v238, %v321
    %v323 = vpop.f32.mrf.mxu0
    %v324 = vpop.f32.mrf.mxu0
    %v325 = vadd.f32 %v238, %v324
    %v326 = vpop.f32.mrf.mxu0
    %327 = vdwg.mxu0
    %v328 = vlaneseq
    %v329 = vand.u32 %v328, 127
    %vm330 = vcmp.lt.s32.totalorder %v329, 6
    %vm331 = vcmp.eq.s32.totalorder %v329, 6
    %v332 = vsel %vm331, 1, 0
    %v333 = vcvt.s32.f32 %v332
    %v334 = vsel %vm330, 1, 0
    %vm335 = vcmp.eq.s32.totalorder %v334, 1
    %v336 = vsel %vm335, %v322, -1e+30
    %v337 = vsel %vm335, %v325, -1e+30
    %338 = vmax.xlane.f32.xlu0 %v336
    %v339 = vpop.xlane.xlu0 %338
    %340 = vmax.xlane.f32.xlu0 %v337
    %v341 = vpop.xlane.xlu0 %340
    %v342 = vsub.f32 %v336, %v339
    %v343 = vsub.f32 %v337, %v341
    %v344 = vmul.f32 %v342, 1.442695
    %v345 = vpow.pop %v344
    %v346 = vmul.f32 %v343, 1.442695
    %v347 = vpow.pop %v346
    %v348 = vsel %vm335, %v345, 0.0
    %v349 = vsel %vm335, %v347, 0.0
    %350 = vadd.xlane.f32.xlu0 %v348
    %v351 = vpop.xlane.xlu0 %350
    %352 = vadd.xlane.f32.xlu0 %v349
    %v353 = vpop.xlane.xlu0 %352
    %v354 = vrcp.pop %v351
    %v355 = vmul.f32 %v348, %v354
    %v356 = vrcp.pop %v353
    %v357 = vmul.f32 %v349, %v356
    %v358 = vmul.f32 %v333, %v322
    %v359 = vmul.f32 %v333, %v325
    %v360 = vadd.f32 %v355, %v358
    %v361 = vadd.f32 %v357, %v359
    %vm362 = vcmask 64512
    %363 = vst.msk [vmem:[%s2] sm:$0xff] %vm362, %v360
    %364 = vst.msk [vmem:[%s2 + $0x8] sm:$0xff] %vm362, %v361
    // Predicated region
    $region18: #{tpu_custom_call.1} parent=1 // pred_check
      _
    $region19: #{tpu_custom_call.1} parent=1 // pred_check_branch
      %366 = sbr.rel (0) target = $region21
    $region20: #{tpu_custom_call.1} parent=1 // pred_region
      _
    $region21: #{tpu_custom_call.1} parent=1 // pred_fallthru
      _
    // Predicated region
    $region22: #{tpu_custom_call.1} parent=1 // pred_check
      _
    $region23: #{tpu_custom_call.1} parent=1 // pred_check_branch
      %368 = sbr.rel (0) target = $region25
    $region24: #{tpu_custom_call.1} parent=1 // pred_region
      _
    $region25: #{tpu_custom_call.1} parent=1 // pred_fallthru
      _
    %369 = vsyncpa [#allocation3], 1
    %370 = vsyncpa [#allocation5], 1

</llo_original>
